<compile_context>
chip_gen: v7x
topology: tpu7x:2x2x1
jax: 0.10.0
libtpu: 0.0.40
codegen_flags: <defaults>
</compile_context>

<pallas_src>
import functools

import jax
import jax.numpy as jnp
from jax.experimental import pallas as pl
from jax.experimental.pallas import tpu as pltpu


_DEFAULT_BATCH_TILE = 4096  # x block is only tb*state_dim*4 B for this net


def _qnet_kernel(x_ref, w1_ref, b1_ref, w2_ref, b2_ref, w3_ref, b3_ref,
                 w4_ref, b4_ref, o_ref):
    bf16 = jnp.bfloat16
    # Cast to bf16 inside the kernel (no extra HBM pass in the wrapper); the
    # MXU accumulates in f32; bias add + ReLU stay f32 on the VPU.
    h = jnp.dot(x_ref[...].astype(bf16), w1_ref[...].astype(bf16),
                preferred_element_type=jnp.float32)
    h = jnp.maximum(h + b1_ref[...], 0.0)

    h = jnp.dot(h.astype(bf16), w2_ref[...].astype(bf16),
                preferred_element_type=jnp.float32)
    h = jnp.maximum(h + b2_ref[...], 0.0)

    h = jnp.dot(h.astype(bf16), w3_ref[...].astype(bf16),
                preferred_element_type=jnp.float32)
    h = jnp.maximum(h + b3_ref[...], 0.0)

    out = jnp.dot(h.astype(bf16), w4_ref[...].astype(bf16),
                  preferred_element_type=jnp.float32)
    # TODO(synk): action_dim=8 -> 8/128-lane masked vst on the output block.
    # A lane-dense repack ((tb,8)->(tb//16,128)) needs a cross-lane relayout
    # that Mosaic's reshape lowering does not reliably support, and output is
    # <1/3 of this kernel's HBM bytes, so it is left as-is.  If callers only
    # ever need argmax_a Q(s,a), fuse the argmax here and emit (tb,1) int32.
    o_ref[...] = (out + b4_ref[...]).astype(o_ref.dtype)


def _tensorcores_per_chip():
    """v7x has 2 TensorCores per chip; v5e/v6e have 1.  Best-effort detection;
    a wrong answer only affects the small-batch tiling split, not correctness."""
    try:
        kind = jax.devices()[0].device_kind.lower()
    except Exception:
        return 1
    return 2 if ("v7" in kind or "7x" in kind) else 1


def _vmem_limit_bytes():
    """Generation-aware scoped-VMEM request: 64 MiB on the 128-MiB parts
    (v5e/v6e), 32 MiB on v7x (64 MiB physical per TensorCore)."""
    cap = None
    try:
        cap = int(pltpu.get_tpu_info().vmem_capacity_bytes)
    except Exception:
        cap = None
    if cap is None:
        cap = (64 if _tensorcores_per_chip() == 2 else 128) * 1024 * 1024
    return (64 if cap >= 100 * 1024 * 1024 else 32) * 1024 * 1024


def _pick_batch_tile(batch, requested, n_tensorcores):
    """Rows per grid step.

    * large batch            -> fixed 4096-row tile (amortizes per-step cost)
    * small batch, 1 TC      -> single tile (grid steps are a serial loop on
                                 v5e/v6e; extra steps are pure overhead)
    * small batch, 2 TCs     -> two tiles so both v7x TensorCores get work
    * user-supplied tiles are rounded to a sublane multiple (8) and clamped so
      a block never exceeds the array extent.
    """
    if batch <= 8:
        return batch                      # full second-minor dim is always legal
    max_tile = (batch // 8) * 8           # largest multiple of 8 <= batch
    if requested is not None:
        return max(8, min((int(requested) // 8) * 8, max_tile))
    if max_tile >= _DEFAULT_BATCH_TILE:
        return _DEFAULT_BATCH_TILE
    if n_tensorcores > 1 and max_tile >= 16:
        return max(8, ((max_tile // 2 + 7) // 8) * 8)
    return max_tile


@functools.partial(jax.jit, static_argnames=("batch_tile",))
def qnet_forward(x, params, *, batch_tile=None):
    """x: (B, state_dim).  params: dict of w{1..4} (in,out) and b{1..4} (1,out).

    Weights may be f32 or bf16 (use prepare_params to store them in bf16
    persistently -- cast once at init / param update, not per call)."""
    B, state_dim = x.shape
    action_dim = params["w4"].shape[1]

    tb = _pick_batch_tile(B, batch_tile, _tensorcores_per_chip())
    n_tiles = pl.cdiv(B, tb)   # ragged last block handled by Pallas (no jnp.pad)

    w = [params[k] for k in ("w1", "w2", "w3", "w4")]
    b = [params[k].astype(jnp.float32) for k in ("b1", "b2", "b3", "b4")]

    # Weights/biases are grid-invariant full blocks.  For wide nets
    # (bf16 weights >= ~4 MiB) single-buffer them: double-buffering a block
    # whose index never changes only burns VMEM (matters on v7x's 64 MiB).
    single_buffer = sum(a.size * a.dtype.itemsize for a in w) >= (4 << 20)

    def full_block(arr, single_buf):
        if single_buf:
            return pl.BlockSpec(arr.shape, lambda i: (0, 0),
                                pipeline_mode=pl.Buffered(1))
        return pl.BlockSpec(arr.shape, lambda i: (0, 0))

    # NOTE(v7x): for hidden_dim >~ 1536-2048 re-derive the tiling (N/K split of
    # w2/w3 with an f32 accumulator scratch) -- full-block weights plus the
    # (tb, hidden) intermediates will not fit 64 MiB physical VMEM.
    h2, hd = w[0].shape[1], w[1].shape[1]
    flops = 2 * B * (state_dim * h2 + h2 * hd + hd * hd + hd * action_dim)
    bytes_accessed = (x.size * x.dtype.itemsize
                      + sum(a.size * a.dtype.itemsize for a in w + b)
                      + B * action_dim * 4)

    out = pl.pallas_call(
        _qnet_kernel,
        out_shape=jax.ShapeDtypeStruct((B, action_dim), jnp.float32),
        grid=(n_tiles,),
        in_specs=[pl.BlockSpec((tb, state_dim), lambda i: (i, 0))]
                 + [spec
                    for wi, bi in zip(w, b)
                    for spec in (full_block(wi, single_buffer),
                                 full_block(bi, False))],
        out_specs=pl.BlockSpec((tb, action_dim), lambda i: (i, 0)),
        compiler_params=pltpu.CompilerParams(
            dimension_semantics=("parallel",),
            vmem_limit_bytes=_vmem_limit_bytes()),
        cost_estimate=pl.CostEstimate(
            flops=flops, transcendentals=0, bytes_accessed=bytes_accessed),
    )(x, w[0], b[0], w[1], b[1], w[2], b[2], w[3], b[3])
    return out


def init_qnet_params(key, state_dim, hidden_dim, action_dim):
    """f32 params matching the PyTorch module's layer shapes / init bounds."""
    h2 = hidden_dim // 2
    dims = [(state_dim, h2), (h2, hidden_dim), (hidden_dim, hidden_dim),
            (hidden_dim, action_dim)]
    params = {}
    for idx, (fan_in, fan_out) in enumerate(dims, start=1):
        key, kw, kb = jax.random.split(key, 3)
        bound = 1.0 / jnp.sqrt(fan_in)
        params[f"w{idx}"] = jax.random.uniform(
            kw, (fan_in, fan_out), jnp.float32, -bound, bound)
        params[f"b{idx}"] = jax.random.uniform(
            kb, (1, fan_out), jnp.float32, -bound, bound)
    return params


def prepare_params(params):
    """Cast weights to bf16 ONCE (outside the forward) so the kernel streams
    2 B/elem of weights from HBM.  Biases stay f32.  Call at init and after
    every optimizer step, never inside the forward."""
    out = dict(params)
    for k in ("w1", "w2", "w3", "w4"):
        out[k] = params[k].astype(jnp.bfloat16)
    for k in ("b1", "b2", "b3", "b4"):
        out[k] = params[k].astype(jnp.float32)
    return out


def qnet_reference(x, params):
    """Pure-JAX reference mirroring the kernel's bf16-matmul / f32-accumulate math."""
    bf = jnp.bfloat16
    dot = lambda a, w: jnp.dot(a.astype(bf), w.astype(bf),
                               preferred_element_type=jnp.float32)
    h = jnp.maximum(dot(x, params["w1"]) + params["b1"], 0.0)
    h = jnp.maximum(dot(h, params["w2"]) + params["b2"], 0.0)
    h = jnp.maximum(dot(h, params["w3"]) + params["b3"], 0.0)
    return dot(h, params["w4"]) + params["b4"]


if __name__ == "__main__":
    key = jax.random.PRNGKey(0)
    batch, state_dim, hidden_dim, action_dim = 8, 16, 32, 8

    key, kx = jax.random.split(key)
    x = jax.random.normal(kx, (batch, state_dim), jnp.float32)
    params_f32 = init_qnet_params(key, state_dim, hidden_dim, action_dim)
    params = prepare_params(params_f32)   # weights -> bf16 once, outside forward

    out = qnet_forward(x, params)
    jax.block_until_ready(out)
    ref = qnet_reference(x, params_f32)
    assert out.shape == (batch, action_dim)
    assert out.dtype == jnp.float32
    assert jnp.allclose(out, ref, atol=1e-2, rtol=1e-2)

    # Ragged batch (not a tile multiple): exercises the cdiv grid / partial
    # last block path -- no jnp.pad, no out[:B] copy.
    key, kx2 = jax.random.split(key)
    x2 = jax.random.normal(kx2, (300, state_dim), jnp.float32)
    out2 = qnet_forward(x2, params)
    jax.block_until_ready(out2)
    ref2 = qnet_reference(x2, params_f32)
    assert out2.shape == (300, action_dim)
    assert jnp.allclose(out2, ref2, atol=1e-2, rtol=1e-2)

    print("KERNEL_OK")
</pallas_src>

<mosaic_0001>
module attributes {stable_mosaic.version = 11 : i64} {
  func.func @_qnet_kernel(%arg0: i32, %arg1: memref<8x16xf32, #tpu.memory_space<vmem>>, %arg2: memref<16x16xbf16, #tpu.memory_space<vmem>>, %arg3: memref<1x16xf32, #tpu.memory_space<vmem>>, %arg4: memref<16x32xbf16, #tpu.memory_space<vmem>>, %arg5: memref<1x32xf32, #tpu.memory_space<vmem>>, %arg6: memref<32x32xbf16, #tpu.memory_space<vmem>>, %arg7: memref<1x32xf32, #tpu.memory_space<vmem>>, %arg8: memref<32x8xbf16, #tpu.memory_space<vmem>>, %arg9: memref<1x8xf32, #tpu.memory_space<vmem>>, %arg10: memref<8x8xf32, #tpu.memory_space<vmem>>) attributes {dimension_semantics = [#tpu.dimension_semantics<parallel>], iteration_bounds = array<i64: 1>, scalar_prefetch = 0 : i64, scratch_operands = 0 : i64, tpu.core_type = #tpu.core_type<tc>, window_params = [{transform_indices = @transform_0, window_bounds = array<i64: 8, 16>}, {pipeline_mode = #tpu.pipeline_mode<synchronous>, transform_indices = @transform_1, window_bounds = array<i64: 16, 16>}, {pipeline_mode = #tpu.pipeline_mode<synchronous>, transform_indices = @transform_2, window_bounds = array<i64: 1, 16>}, {pipeline_mode = #tpu.pipeline_mode<synchronous>, transform_indices = @transform_3, window_bounds = array<i64: 16, 32>}, {pipeline_mode = #tpu.pipeline_mode<synchronous>, transform_indices = @transform_4, window_bounds = array<i64: 1, 32>}, {pipeline_mode = #tpu.pipeline_mode<synchronous>, transform_indices = @transform_5, window_bounds = array<i64: 32, 32>}, {pipeline_mode = #tpu.pipeline_mode<synchronous>, transform_indices = @transform_6, window_bounds = array<i64: 1, 32>}, {pipeline_mode = #tpu.pipeline_mode<synchronous>, transform_indices = @transform_7, window_bounds = array<i64: 32, 8>}, {pipeline_mode = #tpu.pipeline_mode<synchronous>, transform_indices = @transform_8, window_bounds = array<i64: 1, 8>}, {transform_indices = @transform_9, window_bounds = array<i64: 8, 8>}]} {
    %c0 = arith.constant 0 : index
    %c0_0 = arith.constant 0 : index
    %0 = vector.load %arg1[%c0, %c0_0] : memref<8x16xf32, #tpu.memory_space<vmem>>, vector<8x16xf32>
    %1 = arith.truncf %0 : vector<8x16xf32> to vector<8x16xbf16>
    %c0_1 = arith.constant 0 : index
    %c0_2 = arith.constant 0 : index
    %2 = vector.load %arg2[%c0_1, %c0_2] : memref<16x16xbf16, #tpu.memory_space<vmem>>, vector<16x16xbf16>
    %cst = arith.constant dense<0.000000e+00> : vector<8x16xf32>
    %3 = tpu.matmul %1, %2, %cst {dimension_numbers = #tpu.dot_dimension_numbers<[1], [0], [0], [1], [0, 0, 1, 1], [], []>} : vector<8x16xbf16>, vector<16x16xbf16>, vector<8x16xf32> -> vector<8x16xf32>
    %c0_3 = arith.constant 0 : index
    %c0_4 = arith.constant 0 : index
    %4 = vector.load %arg3[%c0_3, %c0_4] : memref<1x16xf32, #tpu.memory_space<vmem>>, vector<1x16xf32>
    %5 = vector.broadcast %4 : vector<1x16xf32> to vector<8x16xf32>
    %6 = arith.addf %3, %5 : vector<8x16xf32>
    %cst_5 = arith.constant 0.000000e+00 : f32
    %7 = vector.broadcast %cst_5 : f32 to vector<8x16xf32>
    %8 = arith.maximumf %6, %7 : vector<8x16xf32>
    %9 = arith.truncf %8 : vector<8x16xf32> to vector<8x16xbf16>
    %c0_6 = arith.constant 0 : index
    %c0_7 = arith.constant 0 : index
    %10 = vector.load %arg4[%c0_6, %c0_7] : memref<16x32xbf16, #tpu.memory_space<vmem>>, vector<16x32xbf16>
    %cst_8 = arith.constant dense<0.000000e+00> : vector<8x32xf32>
    %11 = tpu.matmul %9, %10, %cst_8 {dimension_numbers = #tpu.dot_dimension_numbers<[1], [0], [0], [1], [0, 0, 1, 1], [], []>} : vector<8x16xbf16>, vector<16x32xbf16>, vector<8x32xf32> -> vector<8x32xf32>
    %c0_9 = arith.constant 0 : index
    %c0_10 = arith.constant 0 : index
    %12 = vector.load %arg5[%c0_9, %c0_10] : memref<1x32xf32, #tpu.memory_space<vmem>>, vector<1x32xf32>
    %13 = vector.broadcast %12 : vector<1x32xf32> to vector<8x32xf32>
    %14 = arith.addf %11, %13 : vector<8x32xf32>
    %cst_11 = arith.constant 0.000000e+00 : f32
    %15 = vector.broadcast %cst_11 : f32 to vector<8x32xf32>
    %16 = arith.maximumf %14, %15 : vector<8x32xf32>
    %17 = arith.truncf %16 : vector<8x32xf32> to vector<8x32xbf16>
    %c0_12 = arith.constant 0 : index
    %c0_13 = arith.constant 0 : index
    %18 = vector.load %arg6[%c0_12, %c0_13] : memref<32x32xbf16, #tpu.memory_space<vmem>>, vector<32x32xbf16>
    %cst_14 = arith.constant dense<0.000000e+00> : vector<8x32xf32>
    %19 = tpu.matmul %17, %18, %cst_14 {dimension_numbers = #tpu.dot_dimension_numbers<[1], [0], [0], [1], [0, 0, 1, 1], [], []>} : vector<8x32xbf16>, vector<32x32xbf16>, vector<8x32xf32> -> vector<8x32xf32>
    %c0_15 = arith.constant 0 : index
    %c0_16 = arith.constant 0 : index
    %20 = vector.load %arg7[%c0_15, %c0_16] : memref<1x32xf32, #tpu.memory_space<vmem>>, vector<1x32xf32>
    %21 = vector.broadcast %20 : vector<1x32xf32> to vector<8x32xf32>
    %22 = arith.addf %19, %21 : vector<8x32xf32>
    %cst_17 = arith.constant 0.000000e+00 : f32
    %23 = vector.broadcast %cst_17 : f32 to vector<8x32xf32>
    %24 = arith.maximumf %22, %23 : vector<8x32xf32>
    %25 = arith.truncf %24 : vector<8x32xf32> to vector<8x32xbf16>
    %c0_18 = arith.constant 0 : index
    %c0_19 = arith.constant 0 : index
    %26 = vector.load %arg8[%c0_18, %c0_19] : memref<32x8xbf16, #tpu.memory_space<vmem>>, vector<32x8xbf16>
    %cst_20 = arith.constant dense<0.000000e+00> : vector<8x8xf32>
    %27 = tpu.matmul %25, %26, %cst_20 {dimension_numbers = #tpu.dot_dimension_numbers<[1], [0], [0], [1], [0, 0, 1, 1], [], []>} : vector<8x32xbf16>, vector<32x8xbf16>, vector<8x8xf32> -> vector<8x8xf32>
    %c0_21 = arith.constant 0 : index
    %c0_22 = arith.constant 0 : index
    %28 = vector.load %arg9[%c0_21, %c0_22] : memref<1x8xf32, #tpu.memory_space<vmem>>, vector<1x8xf32>
    %29 = vector.broadcast %28 : vector<1x8xf32> to vector<8x8xf32>
    %30 = arith.addf %27, %29 : vector<8x8xf32>
    %c0_23 = arith.constant 0 : index
    %c0_24 = arith.constant 0 : index
    %31 = vector.load %arg10[%c0_23, %c0_24] : memref<8x8xf32, #tpu.memory_space<vmem>>, vector<8x8xf32>
    tpu.vector_store %arg10[%c0_23, %c0_24], %30 {strides = array<i32>} : memref<8x8xf32, #tpu.memory_space<vmem>>, vector<8x8xf32>,
    return
  }
  func.func @transform_0(%arg0: i32) -> (i32, i32) {
    %c0_i32 = arith.constant 0 : i32
    %c0_i32_0 = arith.constant 0 : i32
    return %arg0, %c0_i32 : i32, i32
  }
  func.func @transform_1(%arg0: i32) -> (i32, i32) {
    %c0_i32 = arith.constant 0 : i32
    %c0_i32_0 = arith.constant 0 : i32
    %c0_i32_1 = arith.constant 0 : i32
    return %c0_i32, %c0_i32_0 : i32, i32
  }
  func.func @transform_2(%arg0: i32) -> (i32, i32) {
    %c0_i32 = arith.constant 0 : i32
    %c0_i32_0 = arith.constant 0 : i32
    %c0_i32_1 = arith.constant 0 : i32
    return %c0_i32, %c0_i32_0 : i32, i32
  }
  func.func @transform_3(%arg0: i32) -> (i32, i32) {
    %c0_i32 = arith.constant 0 : i32
    %c0_i32_0 = arith.constant 0 : i32
    %c0_i32_1 = arith.constant 0 : i32
    return %c0_i32, %c0_i32_0 : i32, i32
  }
  func.func @transform_4(%arg0: i32) -> (i32, i32) {
    %c0_i32 = arith.constant 0 : i32
    %c0_i32_0 = arith.constant 0 : i32
    %c0_i32_1 = arith.constant 0 : i32
    return %c0_i32, %c0_i32_0 : i32, i32
  }
  func.func @transform_5(%arg0: i32) -> (i32, i32) {
    %c0_i32 = arith.constant 0 : i32
    %c0_i32_0 = arith.constant 0 : i32
    %c0_i32_1 = arith.constant 0 : i32
    return %c0_i32, %c0_i32_0 : i32, i32
  }
  func.func @transform_6(%arg0: i32) -> (i32, i32) {
    %c0_i32 = arith.constant 0 : i32
    %c0_i32_0 = arith.constant 0 : i32
    %c0_i32_1 = arith.constant 0 : i32
    return %c0_i32, %c0_i32_0 : i32, i32
  }
  func.func @transform_7(%arg0: i32) -> (i32, i32) {
    %c0_i32 = arith.constant 0 : i32
    %c0_i32_0 = arith.constant 0 : i32
    %c0_i32_1 = arith.constant 0 : i32
    return %c0_i32, %c0_i32_0 : i32, i32
  }
  func.func @transform_8(%arg0: i32) -> (i32, i32) {
    %c0_i32 = arith.constant 0 : i32
    %c0_i32_0 = arith.constant 0 : i32
    %c0_i32_1 = arith.constant 0 : i32
    return %c0_i32, %c0_i32_0 : i32, i32
  }
  func.func @transform_9(%arg0: i32) -> (i32, i32) {
    %c0_i32 = arith.constant 0 : i32
    %c0_i32_0 = arith.constant 0 : i32
    return %arg0, %c0_i32 : i32, i32
  }
}

</mosaic_0001>

<llo_original>
// kernel: qnet_forward.1
$region0: #{qnet_forward.1}
  #allocation0 [shape = 'u32[]', space=smem, size = 0x4, offset = 0x4, fixed_abs, tag = 'smem constant byte address 0x4 - core index']
  #allocation1 [shape = 'u32[144,128]{1,0:T(1,128)}', space=vmem, size = 0x12000, scoped, tag = 'internal scratch']
  %s0 = inlined_call_operand.hbm [shape: f32[8,16], index: 0, kind: input, shape index: {}]
  %s1 = inlined_call_operand.hbm [shape: bf16[16,16], index: 1, kind: input, shape index: {}]
  %s2 = inlined_call_operand.hbm [shape: f32[1,16], index: 2, kind: input, shape index: {}]
  %s3 = inlined_call_operand.hbm [shape: bf16[16,32], index: 3, kind: input, shape index: {}]
  %s4 = inlined_call_operand.hbm [shape: f32[1,32], index: 4, kind: input, shape index: {}]
  %s5 = inlined_call_operand.hbm [shape: bf16[32,32], index: 5, kind: input, shape index: {}]
  %s6 = inlined_call_operand.hbm [shape: f32[1,32], index: 6, kind: input, shape index: {}]
  %s7 = inlined_call_operand.hbm [shape: bf16[32,8], index: 7, kind: input, shape index: {}]
  %s8 = inlined_call_operand.hbm [shape: f32[1,8], index: 8, kind: input, shape index: {}]
  %s9 = inlined_call_operand.hbm [shape: f32[8,8], index: 9, kind: output, shape index: {}]
  %s10 = sld [smem:[#allocation0]]
  $region82: #{qnet_forward.1} parent=0
    _
  %s12 = ssub.s32 1, %s10
  %s13 = scalar_select 0, %s12, %s10
  $region1: #{qnet_forward.1} parent=0
    #allocation2 [shape = 'u8[4096]{0}', space=vmem, size = 0x1000, scoped, tag = 'input window, operand 0, single buffered']
    #allocation3 [shape = 's32[1]{0}', space=sflag, size = 0x4, scoped, tag = 'scoped memory for qnet_forward.1']
    #allocation4 [shape = 's32[1]{0}', space=sflag, size = 0x4, scoped, tag = 'scoped memory for qnet_forward.1']
    #allocation5 [shape = 'u8[4096]{0}', space=vmem, size = 0x1000, scoped, tag = 'input window, operand 1, single buffered']
    #allocation6 [shape = 's32[1]{0}', space=sflag, size = 0x4, scoped, tag = 'scoped memory for qnet_forward.1']
    #allocation7 [shape = 'u8[512]{0}', space=vmem, size = 0x400, scoped, tag = 'input window, operand 2, single buffered']
    #allocation8 [shape = 'u8[4096]{0}', space=vmem, size = 0x1000, scoped, tag = 'input window, operand 3, single buffered']
    #allocation9 [shape = 's32[1]{0}', space=sflag, size = 0x4, scoped, tag = 'scoped memory for qnet_forward.1']
    #allocation10 [shape = 'u8[512]{0}', space=vmem, size = 0x400, scoped, tag = 'input window, operand 4, single buffered']
    #allocation11 [shape = 'u8[8192]{0}', space=vmem, size = 0x2000, scoped, tag = 'input window, operand 5, single buffered']
    #allocation12 [shape = 's32[1]{0}', space=sflag, size = 0x4, scoped, tag = 'scoped memory for qnet_forward.1']
    #allocation13 [shape = 'u8[512]{0}', space=vmem, size = 0x400, scoped, tag = 'input window, operand 6, single buffered']
    #allocation14 [shape = 'u8[8192]{0}', space=vmem, size = 0x2000, scoped, tag = 'input window, operand 7, single buffered']
    #allocation15 [shape = 's32[1]{0}', space=sflag, size = 0x4, scoped, tag = 'scoped memory for qnet_forward.1']
    #allocation16 [shape = 'u8[512]{0}', space=vmem, size = 0x400, scoped, tag = 'input window, operand 8, single buffered']
    #allocation17 [shape = 'u8[4096]{0}', space=vmem, size = 0x1000, scoped, tag = 'output window, operand 0, single buffered']
    %14 = vsyncpa [#allocation3], 0
    %15 = vsyncpa [#allocation6], 0
    %16 = vsyncpa [#allocation9], 0
    %17 = vsyncpa [#allocation12], 0
    %18 = vsyncpa [#allocation15], 0
    %19 = vsyncpa [#allocation4], 0
    // Predicated region
    $region2: #{qnet_forward.1} parent=1 // pred_check
      _
    $region3: #{qnet_forward.1} parent=1 // pred_check_branch
      %21 = sbr.rel (0) target = $region5
    $region4: #{qnet_forward.1} parent=1 // pred_region
      %s23 = ssub.s32 128, 128
      %24 = vsyncadd [#allocation3], %s23
      %s26 = sshll.u32 [#allocation2], 4
      %s27 = int_to_ptr.vmem [resolvable:$true] %s26
      %29 = dma.hbm_to_vmem [thread:$0]  %s0, 128, %s27, [#allocation3]
    $region5: #{qnet_forward.1} parent=1 // pred_fallthru
      _
    // Predicated region
    $region6: #{qnet_forward.1} parent=1 // pred_check
      _
    $region7: #{qnet_forward.1} parent=1 // pred_check_branch
      %31 = sbr.rel (0) target = $region9
    $region8: #{qnet_forward.1} parent=1 // pred_region
      %s33 = ssub.s32 128, 128
      %34 = vsyncadd [#allocation6], %s33
      %s35 = sshll.u32 [#allocation5], 4
      %s36 = int_to_ptr.vmem [resolvable:$true] %s35
      %41 = dma.hbm_to_vmem [thread:$0]  %s1, 128, %s36, [#allocation6], 64, 64, 4
    $region9: #{qnet_forward.1} parent=1 // pred_fallthru
      _
    // Predicated region
    $region10: #{qnet_forward.1} parent=1 // pred_check
      _
    $region11: #{qnet_forward.1} parent=1 // pred_check_branch
      %43 = sbr.rel (0) target = $region13
    $region12: #{qnet_forward.1} parent=1 // pred_region
      %s45 = ssub.s32 16, 16
      %46 = vsyncadd [#allocation6], %s45
      %s48 = sshll.u32 [#allocation7], 4
      %s49 = int_to_ptr.vmem [resolvable:$true] %s48
      %51 = dma.hbm_to_vmem [thread:$0]  %s2, 16, %s49, [#allocation6]
    $region13: #{qnet_forward.1} parent=1 // pred_fallthru
      _
    // Predicated region
    $region14: #{qnet_forward.1} parent=1 // pred_check
      _
    $region15: #{qnet_forward.1} parent=1 // pred_check_branch
      %53 = sbr.rel (0) target = $region17
    $region16: #{qnet_forward.1} parent=1 // pred_region
      %s55 = ssub.s32 128, 128
      %56 = vsyncadd [#allocation9], %s55
      %s57 = sshll.u32 [#allocation8], 4
      %s58 = int_to_ptr.vmem [resolvable:$true] %s57
      %63 = dma.hbm_to_vmem [thread:$0]  %s3, 128, %s58, [#allocation9], 64, 64, 4
    $region17: #{qnet_forward.1} parent=1 // pred_fallthru
      _
    // Predicated region
    $region18: #{qnet_forward.1} parent=1 // pred_check
      _
    $region19: #{qnet_forward.1} parent=1 // pred_check_branch
      %65 = sbr.rel (0) target = $region21
    $region20: #{qnet_forward.1} parent=1 // pred_region
      %s67 = ssub.s32 16, 16
      %68 = vsyncadd [#allocation9], %s67
      %s70 = sshll.u32 [#allocation10], 4
      %s71 = int_to_ptr.vmem [resolvable:$true] %s70
      %73 = dma.hbm_to_vmem [thread:$0]  %s4, 16, %s71, [#allocation9]
    $region21: #{qnet_forward.1} parent=1 // pred_fallthru
      _
    // Predicated region
    $region22: #{qnet_forward.1} parent=1 // pred_check
      _
    $region23: #{qnet_forward.1} parent=1 // pred_check_branch
      %75 = sbr.rel (0) target = $region25
    $region24: #{qnet_forward.1} parent=1 // pred_region
      %s77 = ssub.s32 256, 256
      %78 = vsyncadd [#allocation12], %s77
      %s79 = sshll.u32 [#allocation11], 4
      %s80 = int_to_ptr.vmem [resolvable:$true] %s79
      %85 = dma.hbm_to_vmem [thread:$0]  %s5, 256, %s80, [#allocation12], 64, 64, 4
    $region25: #{qnet_forward.1} parent=1 // pred_fallthru
      _
    // Predicated region
    $region26: #{qnet_forward.1} parent=1 // pred_check
      _
    $region27: #{qnet_forward.1} parent=1 // pred_check_branch
      %87 = sbr.rel (0) target = $region29
    $region28: #{qnet_forward.1} parent=1 // pred_region
      %s89 = ssub.s32 16, 16
      %90 = vsyncadd [#allocation12], %s89
      %s92 = sshll.u32 [#allocation13], 4
      %s93 = int_to_ptr.vmem [resolvable:$true] %s92
      %95 = dma.hbm_to_vmem [thread:$0]  %s6, 16, %s93, [#allocation12]
    $region29: #{qnet_forward.1} parent=1 // pred_fallthru
      _
    // Predicated region
    $region30: #{qnet_forward.1} parent=1 // pred_check
      _
    $region31: #{qnet_forward.1} parent=1 // pred_check_branch
      %97 = sbr.rel (0) target = $region33
    $region32: #{qnet_forward.1} parent=1 // pred_region
      %s99 = ssub.s32 256, 256
      %100 = vsyncadd [#allocation15], %s99
      %s101 = sshll.u32 [#allocation14], 4
      %s102 = int_to_ptr.vmem [resolvable:$true] %s101
      %107 = dma.hbm_to_vmem [thread:$0]  %s7, 256, %s102, [#allocation15], 64, 64, 4
    $region33: #{qnet_forward.1} parent=1 // pred_fallthru
      _
    // Predicated region
    $region34: #{qnet_forward.1} parent=1 // pred_check
      _
    $region35: #{qnet_forward.1} parent=1 // pred_check_branch
      %109 = sbr.rel (0) target = $region37
    $region36: #{qnet_forward.1} parent=1 // pred_region
      %s111 = ssub.s32 16, 16
      %112 = vsyncadd [#allocation15], %s111
      %s114 = sshll.u32 [#allocation16], 4
      %s115 = int_to_ptr.vmem [resolvable:$true] %s114
      %117 = dma.hbm_to_vmem [thread:$0]  %s8, 16, %s115, [#allocation15]
    $region37: #{qnet_forward.1} parent=1 // pred_fallthru
      _
    // Predicated region
    $region38: #{qnet_forward.1} parent=1 // pred_check
      _
    $region39: #{qnet_forward.1} parent=1 // pred_check_branch
      %119 = sbr.rel (0) target = $region41
    $region40: #{qnet_forward.1} parent=1 // pred_region
      %120 = dma.done [#allocation3], 128
    $region41: #{qnet_forward.1} parent=1 // pred_fallthru
      _
    // Predicated region
    $region42: #{qnet_forward.1} parent=1 // pred_check
      _
    $region43: #{qnet_forward.1} parent=1 // pred_check_branch
      %122 = sbr.rel (0) target = $region45
    $region44: #{qnet_forward.1} parent=1 // pred_region
      %123 = dma.done [#allocation6], 128
    $region45: #{qnet_forward.1} parent=1 // pred_fallthru
      _
    // Predicated region
    $region46: #{qnet_forward.1} parent=1 // pred_check
      _
    $region47: #{qnet_forward.1} parent=1 // pred_check_branch
      %125 = sbr.rel (0) target = $region49
    $region48: #{qnet_forward.1} parent=1 // pred_region
      %126 = dma.done [#allocation6], 16
    $region49: #{qnet_forward.1} parent=1 // pred_fallthru
      _
    // Predicated region
    $region50: #{qnet_forward.1} parent=1 // pred_check
      _
    $region51: #{qnet_forward.1} parent=1 // pred_check_branch
      %128 = sbr.rel (0) target = $region53
    $region52: #{qnet_forward.1} parent=1 // pred_region
      %129 = dma.done [#allocation9], 128
    $region53: #{qnet_forward.1} parent=1 // pred_fallthru
      _
    // Predicated region
    $region54: #{qnet_forward.1} parent=1 // pred_check
      _
    $region55: #{qnet_forward.1} parent=1 // pred_check_branch
      %131 = sbr.rel (0) target = $region57
    $region56: #{qnet_forward.1} parent=1 // pred_region
      %132 = dma.done [#allocation9], 16
    $region57: #{qnet_forward.1} parent=1 // pred_fallthru
      _
    // Predicated region
    $region58: #{qnet_forward.1} parent=1 // pred_check
      _
    $region59: #{qnet_forward.1} parent=1 // pred_check_branch
      %134 = sbr.rel (0) target = $region61
    $region60: #{qnet_forward.1} parent=1 // pred_region
      %135 = dma.done [#allocation12], 256
    $region61: #{qnet_forward.1} parent=1 // pred_fallthru
      _
    // Predicated region
    $region62: #{qnet_forward.1} parent=1 // pred_check
      _
    $region63: #{qnet_forward.1} parent=1 // pred_check_branch
      %137 = sbr.rel (0) target = $region65
    $region64: #{qnet_forward.1} parent=1 // pred_region
      %138 = dma.done [#allocation12], 16
    $region65: #{qnet_forward.1} parent=1 // pred_fallthru
      _
    // Predicated region
    $region66: #{qnet_forward.1} parent=1 // pred_check
      _
    $region67: #{qnet_forward.1} parent=1 // pred_check_branch
      %140 = sbr.rel (0) target = $region69
    $region68: #{qnet_forward.1} parent=1 // pred_region
      %141 = dma.done [#allocation15], 256
    $region69: #{qnet_forward.1} parent=1 // pred_fallthru
      _
    // Predicated region
    $region70: #{qnet_forward.1} parent=1 // pred_check
      _
    $region71: #{qnet_forward.1} parent=1 // pred_check_branch
      %143 = sbr.rel (0) target = $region73
    $region72: #{qnet_forward.1} parent=1 // pred_region
      %144 = dma.done [#allocation15], 16
    $region73: #{qnet_forward.1} parent=1 // pred_fallthru
      _
    %v146 = vld [vmem:[#allocation2] sm:$0xff]
    %v147 = vpack.c.bf16 %v146, %v146
    %v148 = vld [vmem:[#allocation5] sm:$0xf]
    %v149 = vld [vmem:[#allocation5 + $0x4] sm:$0xf]
    %v150 = vld [vmem:[#allocation7] sm:$0x1]
    %v152 = vlaneseq
    %v153 = vshrl.u32 %v152, 7
    %v154 = vsub.s32 0, %v153
    %v155 = vrot.slane %v150, %v154
    %v159 = vunpack.c.l.b16 %v148
    %v160 = vunpack.c.l.b16 %v149
    %v161 = vpack.c.b16 %v160, %v159
    %vm163 = vcmask 130048
    %v165 = vsel %vm163, %v147, 0
    %167 = vmatprep.subr.bf16.mxu0 0
    %168 = vmatpush1.bf16.msra.mxu0 %v161
    %169 = vmatprep.subr.bf16.mxu0 0
    %170 = vmatpush1.bf16.msra.mxu0 0
    %171 = vmatprep.subr.bf16.mxu0 0
    %172 = vmatpush1.bf16.msra.mxu0 0
    %173 = vmatprep.subr.bf16.mxu0 0
    %174 = vmatpush1.bf16.msra.mxu0 0
    %175 = vmatprep.subr.bf16.mxu0 0
    %176 = vmatpush1.bf16.msra.mxu0 0
    %177 = vmatprep.subr.bf16.mxu0 0
    %178 = vmatpush1.bf16.msra.mxu0 0
    %179 = vmatprep.subr.bf16.mxu0 0
    %180 = vmatpush1.bf16.msra.mxu0 0
    %181 = vmatprep.subr.bf16.mxu0 0
    %182 = vmatpush1.bf16.msra.mxu0 0
    %183 = vmatprep.subr.bf16.mxu0 0
    %184 = vmatpush1.bf16.msra.mxu0 0
    %185 = vmatprep.subr.bf16.mxu0 0
    %186 = vmatpush1.bf16.msra.mxu0 0
    %187 = vmatprep.subr.bf16.mxu0 0
    %188 = vmatpush1.bf16.msra.mxu0 0
    %189 = vmatprep.subr.bf16.mxu0 0
    %190 = vmatpush1.bf16.msra.mxu0 0
    %191 = vmatprep.subr.bf16.mxu0 0
    %192 = vmatpush1.bf16.msra.mxu0 0
    %193 = vmatprep.subr.bf16.mxu0 0
    %194 = vmatpush1.bf16.msra.mxu0 0
    %195 = vmatprep.subr.bf16.mxu0 0
    %196 = vmatpush1.bf16.msra.mxu0 0
    %197 = vmatprep.subr.bf16.mxu0 0
    %198 = vmatpush1.bf16.msra.mxu0 0
    %199 = vmatprep.mubr.bf16.mxu0 0
    %200 = vmatmul.mubr.bf16.gmra.mrb[0].mxu0 %v165
    %v201 = vpop.f32.mrb[0].mxu0
    %v202 = vadd.f32 %v155, %v201
    %v203 = vpop.f32.mrb[0].mxu0
    %v204 = vpop.f32.mrb[0].mxu0
    %v205 = vpop.f32.mrb[0].mxu0
    %206 = vdwg.mxu0
    %v207 = vmax.f32 %v202, 0.0
    %v208 = vpack.c.bf16 %v207, %v207
    %v209 = vld [vmem:[#allocation8] sm:$0xf]
    %v210 = vld [vmem:[#allocation8 + $0x4] sm:$0xf]
    %v211 = vld [vmem:[#allocation10] sm:$0x1]
    %v213 = vlaneseq
    %v214 = vshrl.u32 %v213, 7
    %v215 = vsub.s32 0, %v214
    %v216 = vrot.slane %v211, %v215
    %v220 = vunpack.c.l.b16 %v209
    %v221 = vunpack.c.l.b16 %v210
    %v222 = vpack.c.b16 %v221, %v220
    %v225 = vsel %vm163, %v208, 0
    %227 = vmatprep.subr.bf16.mxu0 0
    %228 = vmatpush1.bf16.msra.mxu0 %v222
    %229 = vmatprep.subr.bf16.mxu0 0
    %230 = vmatpush1.bf16.msra.mxu0 0
    %231 = vmatprep.subr.bf16.mxu0 0
    %232 = vmatpush1.bf16.msra.mxu0 0
    %233 = vmatprep.subr.bf16.mxu0 0
    %234 = vmatpush1.bf16.msra.mxu0 0
    %235 = vmatprep.subr.bf16.mxu0 0
    %236 = vmatpush1.bf16.msra.mxu0 0
    %237 = vmatprep.subr.bf16.mxu0 0
    %238 = vmatpush1.bf16.msra.mxu0 0
    %239 = vmatprep.subr.bf16.mxu0 0
    %240 = vmatpush1.bf16.msra.mxu0 0
    %241 = vmatprep.subr.bf16.mxu0 0
    %242 = vmatpush1.bf16.msra.mxu0 0
    %243 = vmatprep.subr.bf16.mxu0 0
    %244 = vmatpush1.bf16.msra.mxu0 0
    %245 = vmatprep.subr.bf16.mxu0 0
    %246 = vmatpush1.bf16.msra.mxu0 0
    %247 = vmatprep.subr.bf16.mxu0 0
    %248 = vmatpush1.bf16.msra.mxu0 0
    %249 = vmatprep.subr.bf16.mxu0 0
    %250 = vmatpush1.bf16.msra.mxu0 0
    %251 = vmatprep.subr.bf16.mxu0 0
    %252 = vmatpush1.bf16.msra.mxu0 0
    %253 = vmatprep.subr.bf16.mxu0 0
    %254 = vmatpush1.bf16.msra.mxu0 0
    %255 = vmatprep.subr.bf16.mxu0 0
    %256 = vmatpush1.bf16.msra.mxu0 0
    %257 = vmatprep.subr.bf16.mxu0 0
    %258 = vmatpush1.bf16.msra.mxu0 0
    %259 = vmatprep.mubr.bf16.mxu0 0
    %260 = vmatmul.mubr.bf16.gmra.mrb[0].mxu0 %v225
    %v261 = vpop.f32.mrb[0].mxu0
    %v262 = vadd.f32 %v216, %v261
    %v263 = vpop.f32.mrb[0].mxu0
    %v264 = vpop.f32.mrb[0].mxu0
    %v265 = vpop.f32.mrb[0].mxu0
    %266 = vdwg.mxu0
    %v267 = vmax.f32 %v262, 0.0
    %v268 = vpack.c.bf16 %v267, %v267
    %v269 = vld [vmem:[#allocation11] sm:$0xf]
    %v270 = vld [vmem:[#allocation11 + $0x4] sm:$0xf]
    %v271 = vld [vmem:[#allocation11 + $0x8] sm:$0xf]
    %v272 = vld [vmem:[#allocation11 + $0xc] sm:$0xf]
    %v273 = vld [vmem:[#allocation13] sm:$0x1]
    %v275 = vlaneseq
    %v276 = vshrl.u32 %v275, 7
    %v277 = vsub.s32 0, %v276
    %v278 = vrot.slane %v273, %v277
    %v284 = vunpack.c.l.b16 %v269
    %v285 = vunpack.c.l.b16 %v270
    %v286 = vunpack.c.l.b16 %v271
    %v287 = vunpack.c.l.b16 %v272
    %v288 = vpack.c.b16 %v285, %v284
    %v289 = vpack.c.b16 %v287, %v286
    %vm292 = vcmask 261120
    %v294 = vsel %vm292, %v268, 0
    %296 = vmatprep.subr.bf16.mxu0 0
    %297 = vmatpush1.bf16.msra.mxu0 %v288
    %298 = vmatprep.subr.bf16.mxu0 0
    %299 = vmatpush1.bf16.msra.mxu0 %v289
    %300 = vmatprep.subr.bf16.mxu0 0
    %301 = vmatpush1.bf16.msra.mxu0 0
    %302 = vmatprep.subr.bf16.mxu0 0
    %303 = vmatpush1.bf16.msra.mxu0 0
    %304 = vmatprep.subr.bf16.mxu0 0
    %305 = vmatpush1.bf16.msra.mxu0 0
    %306 = vmatprep.subr.bf16.mxu0 0
    %307 = vmatpush1.bf16.msra.mxu0 0
    %308 = vmatprep.subr.bf16.mxu0 0
    %309 = vmatpush1.bf16.msra.mxu0 0
    %310 = vmatprep.subr.bf16.mxu0 0
    %311 = vmatpush1.bf16.msra.mxu0 0
    %312 = vmatprep.subr.bf16.mxu0 0
    %313 = vmatpush1.bf16.msra.mxu0 0
    %314 = vmatprep.subr.bf16.mxu0 0
    %315 = vmatpush1.bf16.msra.mxu0 0
    %316 = vmatprep.subr.bf16.mxu0 0
    %317 = vmatpush1.bf16.msra.mxu0 0
    %318 = vmatprep.subr.bf16.mxu0 0
    %319 = vmatpush1.bf16.msra.mxu0 0
    %320 = vmatprep.subr.bf16.mxu0 0
    %321 = vmatpush1.bf16.msra.mxu0 0
    %322 = vmatprep.subr.bf16.mxu0 0
    %323 = vmatpush1.bf16.msra.mxu0 0
    %324 = vmatprep.subr.bf16.mxu0 0
    %325 = vmatpush1.bf16.msra.mxu0 0
    %326 = vmatprep.subr.bf16.mxu0 0
    %327 = vmatpush1.bf16.msra.mxu0 0
    %328 = vmatprep.mubr.bf16.mxu0 0
    %329 = vmatmul.mubr.bf16.gmra.mrb[0].mxu0 %v294
    %v330 = vpop.f32.mrb[0].mxu0
    %v331 = vadd.f32 %v278, %v330
    %v332 = vpop.f32.mrb[0].mxu0
    %v333 = vpop.f32.mrb[0].mxu0
    %v334 = vpop.f32.mrb[0].mxu0
    %335 = vdwg.mxu0
    %v336 = vmax.f32 %v331, 0.0
    %v337 = vpack.c.bf16 %v336, %v336
    %v338 = vld [vmem:[#allocation14] sm:$0xf]
    %v339 = vld [vmem:[#allocation14 + $0x4] sm:$0xf]
    %v340 = vld [vmem:[#allocation14 + $0x8] sm:$0xf]
    %v341 = vld [vmem:[#allocation14 + $0xc] sm:$0xf]
    %v342 = vld [vmem:[#allocation16] sm:$0x1]
    %v344 = vlaneseq
    %v345 = vshrl.u32 %v344, 7
    %v346 = vsub.s32 0, %v345
    %v347 = vrot.slane %v342, %v346
    %v353 = vunpack.c.l.b16 %v338
    %v354 = vunpack.c.l.b16 %v339
    %v355 = vunpack.c.l.b16 %v340
    %v356 = vunpack.c.l.b16 %v341
    %v357 = vpack.c.b16 %v354, %v353
    %v358 = vpack.c.b16 %v356, %v355
    %v362 = vsel %vm292, %v337, 0
    %364 = vmatprep.subr.bf16.mxu0 0
    %365 = vmatpush1.bf16.msra.mxu0 %v357
    %366 = vmatprep.subr.bf16.mxu0 0
    %367 = vmatpush1.bf16.msra.mxu0 %v358
    %368 = vmatprep.subr.bf16.mxu0 0
    %369 = vmatpush1.bf16.msra.mxu0 0
    %370 = vmatprep.subr.bf16.mxu0 0
    %371 = vmatpush1.bf16.msra.mxu0 0
    %372 = vmatprep.subr.bf16.mxu0 0
    %373 = vmatpush1.bf16.msra.mxu0 0
    %374 = vmatprep.subr.bf16.mxu0 0
    %375 = vmatpush1.bf16.msra.mxu0 0
    %376 = vmatprep.subr.bf16.mxu0 0
    %377 = vmatpush1.bf16.msra.mxu0 0
    %378 = vmatprep.subr.bf16.mxu0 0
    %379 = vmatpush1.bf16.msra.mxu0 0
    %380 = vmatprep.subr.bf16.mxu0 0
    %381 = vmatpush1.bf16.msra.mxu0 0
    %382 = vmatprep.subr.bf16.mxu0 0
    %383 = vmatpush1.bf16.msra.mxu0 0
    %384 = vmatprep.subr.bf16.mxu0 0
    %385 = vmatpush1.bf16.msra.mxu0 0
    %386 = vmatprep.subr.bf16.mxu0 0
    %387 = vmatpush1.bf16.msra.mxu0 0
    %388 = vmatprep.subr.bf16.mxu0 0
    %389 = vmatpush1.bf16.msra.mxu0 0
    %390 = vmatprep.subr.bf16.mxu0 0
    %391 = vmatpush1.bf16.msra.mxu0 0
    %392 = vmatprep.subr.bf16.mxu0 0
    %393 = vmatpush1.bf16.msra.mxu0 0
    %394 = vmatprep.subr.bf16.mxu0 0
    %395 = vmatpush1.bf16.msra.mxu0 0
    %396 = vmatprep.mubr.bf16.mxu0 0
    %397 = vmatmul.mubr.bf16.gmra.mrb[0].mxu0 %v362
    %v398 = vpop.f32.mrb[0].mxu0
    %v399 = vadd.f32 %v347, %v398
    %v400 = vpop.f32.mrb[0].mxu0
    %v401 = vpop.f32.mrb[0].mxu0
    %v402 = vpop.f32.mrb[0].mxu0
    %403 = vdwg.mxu0
    %vm404 = vcmask 64512
    %405 = vst.msk [vmem:[#allocation17] sm:$0xff] %vm404, %v399
    // Predicated region
    $region74: #{qnet_forward.1} parent=1 // pred_check
      _
    $region75: #{qnet_forward.1} parent=1 // pred_check_branch
      %407 = sbr.rel (0) target = $region77
    $region76: #{qnet_forward.1} parent=1 // pred_region
      %s409 = ssub.s32 128, 128
      %410 = vsyncadd [#allocation4], %s409
      %s412 = sshll.u32 [#allocation17], 4
      %s413 = int_to_ptr.vmem [resolvable:$true] %s412
      %415 = dma.vmem_to_hbm [thread:$0]  %s413, 128, %s9, [#allocation4]
    $region77: #{qnet_forward.1} parent=1 // pred_fallthru
      _
    // Predicated region
    $region78: #{qnet_forward.1} parent=1 // pred_check
      _
    $region79: #{qnet_forward.1} parent=1 // pred_check_branch
      %417 = sbr.rel (0) target = $region81
    $region80: #{qnet_forward.1} parent=1 // pred_region
      %418 = dma.done [#allocation4], 128
    $region81: #{qnet_forward.1} parent=1 // pred_fallthru
      _
    %419 = vsyncpa [#allocation3], 1
    %420 = vsyncpa [#allocation6], 1
    %421 = vsyncpa [#allocation9], 1
    %422 = vsyncpa [#allocation12], 1
    %423 = vsyncpa [#allocation15], 1
    %424 = vsyncpa [#allocation4], 1

</llo_original>
